<compile_context>
chip_gen: v6e
topology: v6e:2x2x1
jax: 0.10.0
libtpu: 0.0.40
codegen_flags: <defaults>
</compile_context>

<pallas_src>
import jax
import jax.numpy as jnp
from jax.experimental import pallas as pl
from jax.experimental.pallas import tpu as pltpu

MIDDLE = 256
N_NETS = 3


def _fused_three_mlp_kernel(x_ref, w1_ref, b1_ref, w2_ref, b2_ref, out_ref):
    # x_ref  : (B, 2)          VMEM   input batch
    # w1_ref : (6, MIDDLE)     VMEM   rows [2n], [2n+1] are net-n first-layer weights
    # b1_ref : (3, MIDDLE)     VMEM   first-layer biases
    # w2_ref : (3, MIDDLE)     VMEM   second-layer weights, lane-dense (one row/net)
    # b2_ref : (3,)            SMEM   second-layer biases (scalars)
    # out_ref: (B, 3)          VMEM   lane-dense output slab (one column/net)
    x = x_ref[...]                     # (B, 2)
    x0 = x[:, 0:1]                     # (B, 1)
    x1 = x[:, 1:2]                     # (B, 1)

    cols = []
    for n in range(N_NETS):            # static unroll, single grid step
        w1_r0 = w1_ref[2 * n:2 * n + 1, :]       # (1, MIDDLE)
        w1_r1 = w1_ref[2 * n + 1:2 * n + 2, :]   # (1, MIDDLE)
        b1_n = b1_ref[n:n + 1, :]                # (1, MIDDLE)
        # First layer as two VPU broadcast multiply-adds (no MXU).
        h = x0 * w1_r0 + x1 * w1_r1 + b1_n       # (B, MIDDLE)
        # Second layer: elementwise multiply + lane reduction (XLU), scalar bias.
        w2_n = w2_ref[n:n + 1, :]                # (1, MIDDLE)
        y = jnp.sum(h * w2_n, axis=-1, keepdims=True) + b2_ref[n]   # (B, 1)
        cols.append(y)

    out_ref[...] = jnp.concatenate(cols, axis=-1).astype(out_ref.dtype)  # (B, 3)


def three_mlp_forward(v, w1s, b1s, w2s, b2s):
    """v: (B, 2); w1s: (3, 2, M); b1s: (3, M); w2s: (3, M, 1); b2s: (3, 1).

    Returns a lane-dense (B, 3) slab: column n is net-n's (B,) output."""
    B = v.shape[0]

    # Layout plumbing in the wrapper (outside the kernel):
    #   * flatten W1 to (6, M) so the kernel indexes sublane rows directly,
    #   * drop the trailing singleton of W2 -> (3, M) lane-dense rows,
    #   * flatten b2 -> (3,) scalars for SMEM.
    w1_flat = w1s.reshape(N_NETS * 2, MIDDLE)      # (6, M)
    w2_rows = w2s[:, :, 0]                         # (3, M)
    b2_flat = b2s[:, 0]                            # (3,)

    flops = N_NETS * (2 * B * 2 * MIDDLE + 2 * B * MIDDLE)
    bytes_accessed = 4 * (v.size + w1_flat.size + b1s.size + w2_rows.size
                          + b2_flat.size + B * N_NETS)

    out = pl.pallas_call(
        _fused_three_mlp_kernel,
        out_shape=jax.ShapeDtypeStruct((B, N_NETS), jnp.float32),
        in_specs=[
            pl.BlockSpec(memory_space=pltpu.MemorySpace.VMEM),   # v
            pl.BlockSpec(memory_space=pltpu.MemorySpace.VMEM),   # w1 (6, M)
            pl.BlockSpec(memory_space=pltpu.MemorySpace.VMEM),   # b1 (3, M)
            pl.BlockSpec(memory_space=pltpu.MemorySpace.VMEM),   # w2 (3, M)
            pl.BlockSpec(memory_space=pltpu.MemorySpace.SMEM),   # b2 (3,)
        ],
        out_specs=pl.BlockSpec(memory_space=pltpu.MemorySpace.VMEM),
        cost_estimate=pl.CostEstimate(flops=flops, transcendentals=0,
                                      bytes_accessed=bytes_accessed),
    )(v, w1_flat, b1s, w2_rows, b2_flat)
    return out  # (B, 3)


def init_params(key):
    """Deterministic synthetic init (uniform, like torch's default scale),
    stored in the torch-like layouts of the original module."""
    keys = jax.random.split(key, 13)
    bound1 = 1.0 / jnp.sqrt(2.0)            # Linear(2, 256)
    bound2 = 1.0 / jnp.sqrt(float(MIDDLE))  # Linear(256, 1)

    def u(k, shape, bound):
        return jax.random.uniform(k, shape, jnp.float32, -bound, bound)

    w1s = jnp.stack([u(keys[i], (2, MIDDLE), bound1) for i in range(3)])      # (3, 2, M)
    b1s = jnp.stack([u(keys[3 + i], (MIDDLE,), bound1) for i in range(3)])    # (3, M)
    w2s = jnp.stack([u(keys[6 + i], (MIDDLE, 1), bound2) for i in range(3)])  # (3, M, 1)
    b2s = jnp.stack([u(keys[9 + i], (1,), bound2) for i in range(3)])         # (3, 1)
    net_d = jax.random.uniform(keys[12], (1,), jnp.float32)                   # torch.rand(1)
    return w1s, b1s, w2s, b2s, net_d


def two_dim_state_predictor_forward(v, params):
    """Mirrors TwoDimState_Linear_Predictor_Independent.forward."""
    w1s, b1s, w2s, b2s, net_d = params
    out = three_mlp_forward(v, w1s, b1s, w2s, b2s)          # (B, 3) lane-dense
    out_a = out[:, 0:1]
    out_b = out[:, 1:2]
    out_c = out[:, 2:3]
    return out_a, out_b, out_c, net_d


if __name__ == "__main__":
    key = jax.random.PRNGKey(0)
    pkey, xkey = jax.random.split(key)
    params = init_params(pkey)

    B = 8
    v = jax.random.normal(xkey, (B, 2), jnp.float32)

    out_a, out_b, out_c, net_d = two_dim_state_predictor_forward(v, params)
    jax.block_until_ready((out_a, out_b, out_c, net_d))

    # Pure-JAX reference check.
    w1s, b1s, w2s, b2s, _ = params

    def ref(n):
        return (v @ w1s[n] + b1s[n]) @ w2s[n] + b2s[n]

    assert jnp.allclose(out_a, ref(0), atol=1e-5)
    assert jnp.allclose(out_b, ref(1), atol=1e-5)
    assert jnp.allclose(out_c, ref(2), atol=1e-5)
    assert out_a.shape == (B, 1) and out_b.shape == (B, 1) and out_c.shape == (B, 1)
    assert net_d.shape == (1,)

    print("KERNEL_OK")
</pallas_src>

<mosaic_0001>
module attributes {stable_mosaic.version = 11 : i64} {
  func.func @_fused_three_mlp_kernel(%arg0: memref<8x2xf32, #tpu.memory_space<vmem>>, %arg1: memref<6x256xf32, #tpu.memory_space<vmem>>, %arg2: memref<3x256xf32, #tpu.memory_space<vmem>>, %arg3: memref<3x256xf32, #tpu.memory_space<vmem>>, %arg4: memref<3xf32, #tpu.memory_space<smem>>, %arg5: memref<8x3xf32, #tpu.memory_space<vmem>>) attributes {dimension_semantics = [], scalar_prefetch = 0 : i64, scratch_operands = 0 : i64, tpu.core_type = #tpu.core_type<tc>} {
    %c0 = arith.constant 0 : index
    %c0_0 = arith.constant 0 : index
    %0 = vector.load %arg0[%c0, %c0_0] : memref<8x2xf32, #tpu.memory_space<vmem>>, vector<8x2xf32>
    %1 = vector.extract_strided_slice %0 {offsets = [0, 0], sizes = [8, 1], strides = [1, 1]} : vector<8x2xf32> to vector<8x1xf32>
    %2 = vector.extract_strided_slice %0 {offsets = [0, 1], sizes = [8, 1], strides = [1, 1]} : vector<8x2xf32> to vector<8x1xf32>
    %c0_1 = arith.constant 0 : index
    %c0_2 = arith.constant 0 : index
    %3 = vector.load %arg1[%c0_1, %c0_2] : memref<6x256xf32, #tpu.memory_space<vmem>>, vector<1x256xf32>
    %c1 = arith.constant 1 : index
    %c0_3 = arith.constant 0 : index
    %4 = vector.load %arg1[%c1, %c0_3] : memref<6x256xf32, #tpu.memory_space<vmem>>, vector<1x256xf32>
    %c0_4 = arith.constant 0 : index
    %c0_5 = arith.constant 0 : index
    %5 = vector.load %arg2[%c0_4, %c0_5] : memref<3x256xf32, #tpu.memory_space<vmem>>, vector<1x256xf32>
    %6 = vector.broadcast %1 : vector<8x1xf32> to vector<8x256xf32>
    %7 = vector.broadcast %3 : vector<1x256xf32> to vector<8x256xf32>
    %8 = arith.mulf %6, %7 : vector<8x256xf32>
    %9 = vector.broadcast %2 : vector<8x1xf32> to vector<8x256xf32>
    %10 = vector.broadcast %4 : vector<1x256xf32> to vector<8x256xf32>
    %11 = arith.mulf %9, %10 : vector<8x256xf32>
    %12 = arith.addf %8, %11 : vector<8x256xf32>
    %13 = vector.broadcast %5 : vector<1x256xf32> to vector<8x256xf32>
    %14 = arith.addf %12, %13 : vector<8x256xf32>
    %c0_6 = arith.constant 0 : index
    %c0_7 = arith.constant 0 : index
    %15 = vector.load %arg3[%c0_6, %c0_7] : memref<3x256xf32, #tpu.memory_space<vmem>>, vector<1x256xf32>
    %16 = vector.broadcast %15 : vector<1x256xf32> to vector<8x256xf32>
    %17 = arith.mulf %14, %16 : vector<8x256xf32>
    %cst = arith.constant dense<0.000000e+00> : vector<8xf32>
    %18 = vector.multi_reduction <add>, %17, %cst [1] : vector<8x256xf32> to vector<8xf32>
    %19 = vector.shape_cast %18 : vector<8xf32> to vector<8x1xf32>
    %c0_8 = arith.constant 0 : index
    %20 = memref.load %arg4[%c0_8] : memref<3xf32, #tpu.memory_space<smem>>
    %21 = vector.broadcast %20 : f32 to vector<8x1xf32>
    %22 = arith.addf %19, %21 : vector<8x1xf32>
    %c2 = arith.constant 2 : index
    %c0_9 = arith.constant 0 : index
    %23 = vector.load %arg1[%c2, %c0_9] : memref<6x256xf32, #tpu.memory_space<vmem>>, vector<1x256xf32>
    %c3 = arith.constant 3 : index
    %c0_10 = arith.constant 0 : index
    %24 = vector.load %arg1[%c3, %c0_10] : memref<6x256xf32, #tpu.memory_space<vmem>>, vector<1x256xf32>
    %c1_11 = arith.constant 1 : index
    %c0_12 = arith.constant 0 : index
    %25 = vector.load %arg2[%c1_11, %c0_12] : memref<3x256xf32, #tpu.memory_space<vmem>>, vector<1x256xf32>
    %26 = vector.broadcast %1 : vector<8x1xf32> to vector<8x256xf32>
    %27 = vector.broadcast %23 : vector<1x256xf32> to vector<8x256xf32>
    %28 = arith.mulf %26, %27 : vector<8x256xf32>
    %29 = vector.broadcast %2 : vector<8x1xf32> to vector<8x256xf32>
    %30 = vector.broadcast %24 : vector<1x256xf32> to vector<8x256xf32>
    %31 = arith.mulf %29, %30 : vector<8x256xf32>
    %32 = arith.addf %28, %31 : vector<8x256xf32>
    %33 = vector.broadcast %25 : vector<1x256xf32> to vector<8x256xf32>
    %34 = arith.addf %32, %33 : vector<8x256xf32>
    %c1_13 = arith.constant 1 : index
    %c0_14 = arith.constant 0 : index
    %35 = vector.load %arg3[%c1_13, %c0_14] : memref<3x256xf32, #tpu.memory_space<vmem>>, vector<1x256xf32>
    %36 = vector.broadcast %35 : vector<1x256xf32> to vector<8x256xf32>
    %37 = arith.mulf %34, %36 : vector<8x256xf32>
    %cst_15 = arith.constant dense<0.000000e+00> : vector<8xf32>
    %38 = vector.multi_reduction <add>, %37, %cst_15 [1] : vector<8x256xf32> to vector<8xf32>
    %39 = vector.shape_cast %38 : vector<8xf32> to vector<8x1xf32>
    %c1_16 = arith.constant 1 : index
    %40 = memref.load %arg4[%c1_16] : memref<3xf32, #tpu.memory_space<smem>>
    %41 = vector.broadcast %40 : f32 to vector<8x1xf32>
    %42 = arith.addf %39, %41 : vector<8x1xf32>
    %c4 = arith.constant 4 : index
    %c0_17 = arith.constant 0 : index
    %43 = vector.load %arg1[%c4, %c0_17] : memref<6x256xf32, #tpu.memory_space<vmem>>, vector<1x256xf32>
    %c5 = arith.constant 5 : index
    %c0_18 = arith.constant 0 : index
    %44 = vector.load %arg1[%c5, %c0_18] : memref<6x256xf32, #tpu.memory_space<vmem>>, vector<1x256xf32>
    %c2_19 = arith.constant 2 : index
    %c0_20 = arith.constant 0 : index
    %45 = vector.load %arg2[%c2_19, %c0_20] : memref<3x256xf32, #tpu.memory_space<vmem>>, vector<1x256xf32>
    %46 = vector.broadcast %1 : vector<8x1xf32> to vector<8x256xf32>
    %47 = vector.broadcast %43 : vector<1x256xf32> to vector<8x256xf32>
    %48 = arith.mulf %46, %47 : vector<8x256xf32>
    %49 = vector.broadcast %2 : vector<8x1xf32> to vector<8x256xf32>
    %50 = vector.broadcast %44 : vector<1x256xf32> to vector<8x256xf32>
    %51 = arith.mulf %49, %50 : vector<8x256xf32>
    %52 = arith.addf %48, %51 : vector<8x256xf32>
    %53 = vector.broadcast %45 : vector<1x256xf32> to vector<8x256xf32>
    %54 = arith.addf %52, %53 : vector<8x256xf32>
    %c2_21 = arith.constant 2 : index
    %c0_22 = arith.constant 0 : index
    %55 = vector.load %arg3[%c2_21, %c0_22] : memref<3x256xf32, #tpu.memory_space<vmem>>, vector<1x256xf32>
    %56 = vector.broadcast %55 : vector<1x256xf32> to vector<8x256xf32>
    %57 = arith.mulf %54, %56 : vector<8x256xf32>
    %cst_23 = arith.constant dense<0.000000e+00> : vector<8xf32>
    %58 = vector.multi_reduction <add>, %57, %cst_23 [1] : vector<8x256xf32> to vector<8xf32>
    %59 = vector.shape_cast %58 : vector<8xf32> to vector<8x1xf32>
    %c2_24 = arith.constant 2 : index
    %60 = memref.load %arg4[%c2_24] : memref<3xf32, #tpu.memory_space<smem>>
    %61 = vector.broadcast %60 : f32 to vector<8x1xf32>
    %62 = arith.addf %59, %61 : vector<8x1xf32>
    %63 = tpu.concatenate %22, %42, %62 in 1 : vector<8x1xf32>, vector<8x1xf32>, vector<8x1xf32> -> vector<8x3xf32>
    %c0_25 = arith.constant 0 : index
    %c0_26 = arith.constant 0 : index
    %64 = vector.load %arg5[%c0_25, %c0_26] : memref<8x3xf32, #tpu.memory_space<vmem>>, vector<8x3xf32>
    tpu.vector_store %arg5[%c0_25, %c0_26], %63 {strides = array<i32>} : memref<8x3xf32, #tpu.memory_space<vmem>>, vector<8x3xf32>,
    return
  }
}

</mosaic_0001>

<llo_original>
// kernel: tpu_custom_call.1
$region0: #{tpu_custom_call.1}
  #allocation0 [shape = 'u32[]', space=smem, size = 0x4, offset = 0x4, fixed_abs, tag = 'smem constant byte address 0x4 - core index']
  #allocation1 [shape = 'u32[144,128]{1,0:T(1,128)}', space=vmem, size = 0x12000, scoped, tag = 'internal scratch']
  %s0 = inlined_call_operand.vmem [shape: f32[8,2], index: 0, kind: input, shape index: {}]
  %s1 = inlined_call_operand.hbm [shape: f32[6,256], index: 1, kind: input, shape index: {}]
  %s2 = inlined_call_operand.vmem [shape: f32[3,256], index: 2, kind: input, shape index: {}]
  %s3 = inlined_call_operand.hbm [shape: f32[3,256], index: 3, kind: input, shape index: {}]
  %s4 = inlined_call_operand.vmem [shape: f32[3], index: 4, kind: input, shape index: {}]
  %s5 = inlined_call_operand.vmem [shape: f32[8,3], index: 5, kind: output, shape index: {}]
  %s6 = sld [smem:[#allocation0]]
  $region42: #{tpu_custom_call.1} parent=0
    _
  %s8 = ssub.s32 1, %s6
  %s9 = scalar_select 0, %s8, %s6
  $region1: #{tpu_custom_call.1} parent=0
    #allocation2 [shape = 'u8[8192]{0}', space=vmem, size = 0x2000, scoped, tag = 'input window, operand 1, single buffered']
    #allocation3 [shape = 's32[1]{0}', space=sflag, size = 0x4, scoped, tag = 'scoped memory for tpu_custom_call.1']
    #allocation4 [shape = 's32[1]{0}', space=sflag, size = 0x4, scoped, tag = 'scoped memory for tpu_custom_call.1']
    #allocation5 [shape = 'u8[4096]{0}', space=vmem, size = 0x1000, scoped, tag = 'input window, operand 3, single buffered']
    #allocation6 [shape = 's32[1]{0}', space=sflag, size = 0x4, scoped, tag = 'scoped memory for tpu_custom_call.1']
    #allocation7 [shape = 'u8[512]{0}', space=smem, size = 0x200, scoped, tag = 'input window, operand 4, single buffered']
    %10 = vsyncpa [#allocation3], 0
    %11 = vsyncpa [#allocation6], 0
    %12 = vsyncpa [#allocation4], 0
    // Predicated region
    $region2: #{tpu_custom_call.1} parent=1 // pred_check
      _
    $region3: #{tpu_custom_call.1} parent=1 // pred_check_branch
      %14 = sbr.rel (0) target = $region5
    $region4: #{tpu_custom_call.1} parent=1 // pred_region
      _
    $region5: #{tpu_custom_call.1} parent=1 // pred_fallthru
      _
    // Predicated region
    $region6: #{tpu_custom_call.1} parent=1 // pred_check
      _
    $region7: #{tpu_custom_call.1} parent=1 // pred_check_branch
      %16 = sbr.rel (0) target = $region9
    $region8: #{tpu_custom_call.1} parent=1 // pred_region
      %s18 = ssub.s32 256, 256
      %19 = vsyncadd [#allocation3], %s18
      %s21 = sshll.u32 [#allocation2], 4
      %s22 = int_to_ptr.vmem [resolvable:$true] %s21
      %24 = dma.hbm_to_vmem [thread:$0]  %s1, 256, %s22, [#allocation3]
    $region9: #{tpu_custom_call.1} parent=1 // pred_fallthru
      _
    // Predicated region
    $region10: #{tpu_custom_call.1} parent=1 // pred_check
      _
    $region11: #{tpu_custom_call.1} parent=1 // pred_check_branch
      %26 = sbr.rel (0) target = $region13
    $region12: #{tpu_custom_call.1} parent=1 // pred_region
      _
    $region13: #{tpu_custom_call.1} parent=1 // pred_fallthru
      _
    // Predicated region
    $region14: #{tpu_custom_call.1} parent=1 // pred_check
      _
    $region15: #{tpu_custom_call.1} parent=1 // pred_check_branch
      %28 = sbr.rel (0) target = $region17
    $region16: #{tpu_custom_call.1} parent=1 // pred_region
      %s30 = ssub.s32 128, 128
      %31 = vsyncadd [#allocation6], %s30
      %s33 = sshll.u32 [#allocation5], 4
      %s34 = int_to_ptr.vmem [resolvable:$true] %s33
      %36 = dma.hbm_to_vmem [thread:$0]  %s3, 128, %s34, [#allocation6]
    $region17: #{tpu_custom_call.1} parent=1 // pred_fallthru
      _
    // Predicated region
    $region18: #{tpu_custom_call.1} parent=1 // pred_check
      _
    $region19: #{tpu_custom_call.1} parent=1 // pred_check_branch
      %38 = sbr.rel (0) target = $region21
    $region20: #{tpu_custom_call.1} parent=1 // pred_region
      %s40 = ssub.s32 16, 16
      %41 = vsyncadd [#allocation4], %s40
      %s43 = sshll.u32 %s4, 4
      %s44 = int_to_ptr.vmem [resolvable:$true] %s43
      %46 = dma.vmem_to_smem %s44, 16, [#allocation7], [#allocation4]
    $region21: #{tpu_custom_call.1} parent=1 // pred_fallthru
      _
    // Predicated region
    $region22: #{tpu_custom_call.1} parent=1 // pred_check
      _
    $region23: #{tpu_custom_call.1} parent=1 // pred_check_branch
      %48 = sbr.rel (0) target = $region25
    $region24: #{tpu_custom_call.1} parent=1 // pred_region
      %49 = dma.done [#allocation3], 256
    $region25: #{tpu_custom_call.1} parent=1 // pred_fallthru
      _
    // Predicated region
    $region26: #{tpu_custom_call.1} parent=1 // pred_check
      _
    $region27: #{tpu_custom_call.1} parent=1 // pred_check_branch
      %51 = sbr.rel (0) target = $region29
    $region28: #{tpu_custom_call.1} parent=1 // pred_region
      %52 = dma.done [#allocation6], 128
    $region29: #{tpu_custom_call.1} parent=1 // pred_fallthru
      _
    // Predicated region
    $region30: #{tpu_custom_call.1} parent=1 // pred_check
      _
    $region31: #{tpu_custom_call.1} parent=1 // pred_check_branch
      %54 = sbr.rel (0) target = $region33
    $region32: #{tpu_custom_call.1} parent=1 // pred_region
      %55 = dma.done [#allocation4], 16
    $region33: #{tpu_custom_call.1} parent=1 // pred_fallthru
      _
    %56 = sfence
    %v57 = vld [vmem:[%s0] sm:$0xff]
    %v58 = vld [vmem:[#allocation2] ss:$8 sm:$0x3]
    %s59 = scalar_lea.vmem [#allocation2], 1
    %v60 = vld [vmem:[%s59] ss:$8 sm:$0x3]
    %v61 = vld [vmem:[%s2] ss:$4 sm:$0x3]
    %63 = vset.pattern.permute.xlu0 0
    %64 = vperm.xlu0 %63, %v57
    %v65 = vpop.permute.xlu0 %64
    %v68 = vlaneseq
    %v69 = vshrl.u32 %v68, 7
    %v70 = vsub.s32 0, %v69
    %v71 = vrot.slane %v58, %v70
    %v72 = vlaneseq
    %v73 = vshrl.u32 %v72, 7
    %v74 = vsub.s32 1, %v73
    %v75 = vrot.slane %v58, %v74
    %v78 = vmul.f32 %v65, %v71
    %v79 = vmul.f32 %v65, %v75
    %80 = vset.pattern.permute.xlu0 1
    %81 = vperm.xlu0 %80, %v57
    %v82 = vpop.permute.xlu0 %81
    %v85 = vlaneseq
    %v86 = vshrl.u32 %v85, 7
    %v87 = vsub.s32 0, %v86
    %v88 = vrot.slane %v60, %v87
    %v89 = vlaneseq
    %v90 = vshrl.u32 %v89, 7
    %v91 = vsub.s32 1, %v90
    %v92 = vrot.slane %v60, %v91
    %v95 = vmul.f32 %v82, %v88
    %v96 = vmul.f32 %v82, %v92
    %v97 = vadd.f32 %v78, %v95
    %v98 = vadd.f32 %v79, %v96
    %v100 = vlaneseq
    %v101 = vshrl.u32 %v100, 7
    %v102 = vsub.s32 0, %v101
    %v103 = vrot.slane %v61, %v102
    %v104 = vlaneseq
    %v105 = vshrl.u32 %v104, 7
    %v106 = vsub.s32 1, %v105
    %v107 = vrot.slane %v61, %v106
    %v110 = vadd.f32 %v97, %v103
    %v111 = vadd.f32 %v98, %v107
    %v112 = vld [vmem:[#allocation5] ss:$4 sm:$0x3]
    %v114 = vlaneseq
    %v115 = vshrl.u32 %v114, 7
    %v116 = vsub.s32 0, %v115
    %v117 = vrot.slane %v112, %v116
    %v118 = vlaneseq
    %v119 = vshrl.u32 %v118, 7
    %v120 = vsub.s32 1, %v119
    %v121 = vrot.slane %v112, %v120
    %v124 = vmul.f32 %v110, %v117
    %v125 = vmul.f32 %v111, %v121
    %v126 = vadd.f32 %v124, %v125
    %127 = vadd.xlane.f32.xlu0 %v126
    %v128 = vpop.xlane.xlu0 %127
    %s129 = sld [smem:[#allocation7]]
    %v130 = vstv %s129
    %v131 = vadd.f32 %v128, %v130
    %s132 = scalar_lea.vmem [#allocation2], 2
    %v133 = vld [vmem:[%s132] ss:$8 sm:$0x3]
    %s134 = scalar_lea.vmem [#allocation2], 3
    %v135 = vld [vmem:[%s134] ss:$8 sm:$0x3]
    %s136 = scalar_lea.vmem %s2, 1
    %v137 = vld [vmem:[%s136] ss:$4 sm:$0x3]
    %v139 = vlaneseq
    %v140 = vshrl.u32 %v139, 7
    %v141 = vsub.s32 0, %v140
    %v142 = vrot.slane %v133, %v141
    %v143 = vlaneseq
    %v144 = vshrl.u32 %v143, 7
    %v145 = vsub.s32 1, %v144
    %v146 = vrot.slane %v133, %v145
    %v149 = vmul.f32 %v65, %v142
    %v150 = vmul.f32 %v65, %v146
    %v152 = vlaneseq
    %v153 = vshrl.u32 %v152, 7
    %v154 = vsub.s32 0, %v153
    %v155 = vrot.slane %v135, %v154
    %v156 = vlaneseq
    %v157 = vshrl.u32 %v156, 7
    %v158 = vsub.s32 1, %v157
    %v159 = vrot.slane %v135, %v158
    %v162 = vmul.f32 %v82, %v155
    %v163 = vmul.f32 %v82, %v159
    %v164 = vadd.f32 %v149, %v162
    %v165 = vadd.f32 %v150, %v163
    %v167 = vlaneseq
    %v168 = vshrl.u32 %v167, 7
    %v169 = vsub.s32 0, %v168
    %v170 = vrot.slane %v137, %v169
    %v171 = vlaneseq
    %v172 = vshrl.u32 %v171, 7
    %v173 = vsub.s32 1, %v172
    %v174 = vrot.slane %v137, %v173
    %v177 = vadd.f32 %v164, %v170
    %v178 = vadd.f32 %v165, %v174
    %s179 = scalar_lea.vmem [#allocation5], 1
    %v180 = vld [vmem:[%s179] ss:$4 sm:$0x3]
    %v182 = vlaneseq
    %v183 = vshrl.u32 %v182, 7
    %v184 = vsub.s32 0, %v183
    %v185 = vrot.slane %v180, %v184
    %v186 = vlaneseq
    %v187 = vshrl.u32 %v186, 7
    %v188 = vsub.s32 1, %v187
    %v189 = vrot.slane %v180, %v188
    %v192 = vmul.f32 %v177, %v185
    %v193 = vmul.f32 %v178, %v189
    %v194 = vadd.f32 %v192, %v193
    %195 = vadd.xlane.f32.xlu0 %v194
    %v196 = vpop.xlane.xlu0 %195
    %s197 = sld [smem:[#allocation7 + $0x1]]
    %v198 = vstv %s197
    %v199 = vadd.f32 %v196, %v198
    %s200 = scalar_lea.vmem [#allocation2], 4
    %v201 = vld [vmem:[%s200] ss:$8 sm:$0x3]
    %s202 = scalar_lea.vmem [#allocation2], 5
    %v203 = vld [vmem:[%s202] ss:$8 sm:$0x3]
    %s204 = scalar_lea.vmem %s2, 2
    %v205 = vld [vmem:[%s204] ss:$4 sm:$0x3]
    %v207 = vlaneseq
    %v208 = vshrl.u32 %v207, 7
    %v209 = vsub.s32 0, %v208
    %v210 = vrot.slane %v201, %v209
    %v211 = vlaneseq
    %v212 = vshrl.u32 %v211, 7
    %v213 = vsub.s32 1, %v212
    %v214 = vrot.slane %v201, %v213
    %v217 = vmul.f32 %v65, %v210
    %v218 = vmul.f32 %v65, %v214
    %v220 = vlaneseq
    %v221 = vshrl.u32 %v220, 7
    %v222 = vsub.s32 0, %v221
    %v223 = vrot.slane %v203, %v222
    %v224 = vlaneseq
    %v225 = vshrl.u32 %v224, 7
    %v226 = vsub.s32 1, %v225
    %v227 = vrot.slane %v203, %v226
    %v230 = vmul.f32 %v82, %v223
    %v231 = vmul.f32 %v82, %v227
    %v232 = vadd.f32 %v217, %v230
    %v233 = vadd.f32 %v218, %v231
    %v235 = vlaneseq
    %v236 = vshrl.u32 %v235, 7
    %v237 = vsub.s32 0, %v236
    %v238 = vrot.slane %v205, %v237
    %v239 = vlaneseq
    %v240 = vshrl.u32 %v239, 7
    %v241 = vsub.s32 1, %v240
    %v242 = vrot.slane %v205, %v241
    %v245 = vadd.f32 %v232, %v238
    %v246 = vadd.f32 %v233, %v242
    %s247 = scalar_lea.vmem [#allocation5], 2
    %v248 = vld [vmem:[%s247] ss:$4 sm:$0x3]
    %v250 = vlaneseq
    %v251 = vshrl.u32 %v250, 7
    %v252 = vsub.s32 0, %v251
    %v253 = vrot.slane %v248, %v252
    %v254 = vlaneseq
    %v255 = vshrl.u32 %v254, 7
    %v256 = vsub.s32 1, %v255
    %v257 = vrot.slane %v248, %v256
    %v260 = vmul.f32 %v245, %v253
    %v261 = vmul.f32 %v246, %v257
    %v262 = vadd.f32 %v260, %v261
    %263 = vadd.xlane.f32.xlu0 %v262
    %v264 = vpop.xlane.xlu0 %263
    %s265 = sld [smem:[#allocation7 + $0x2]]
    %v266 = vstv %s265
    %v267 = vadd.f32 %v264, %v266
    %vm268 = vcmask 7168
    %v269 = vsel %vm268, %v131, %v199
    %vm270 = vcmask 15360
    %v271 = vsel %vm270, %v269, %v267
    %vm272 = vcmask 23552
    %273 = vst.msk [vmem:[%s5] sm:$0xff] %vm272, %v271
    // Predicated region
    $region34: #{tpu_custom_call.1} parent=1 // pred_check
      _
    $region35: #{tpu_custom_call.1} parent=1 // pred_check_branch
      %275 = sbr.rel (0) target = $region37
    $region36: #{tpu_custom_call.1} parent=1 // pred_region
      _
    $region37: #{tpu_custom_call.1} parent=1 // pred_fallthru
      _
    // Predicated region
    $region38: #{tpu_custom_call.1} parent=1 // pred_check
      _
    $region39: #{tpu_custom_call.1} parent=1 // pred_check_branch
      %277 = sbr.rel (0) target = $region41
    $region40: #{tpu_custom_call.1} parent=1 // pred_region
      _
    $region41: #{tpu_custom_call.1} parent=1 // pred_fallthru
      _
    %278 = vsyncpa [#allocation3], 1
    %279 = vsyncpa [#allocation6], 1
    %280 = vsyncpa [#allocation4], 1

</llo_original>
